<compile_context>
chip_gen: v6e
topology: v6e:2x2x1
jax: 0.10.0
libtpu: 0.0.40
codegen_flags: <defaults>
</compile_context>

<pallas_src>
import jax
import jax.numpy as jnp
from jax import lax
from jax.experimental import pallas as pl
from jax.experimental.pallas import tpu as pltpu


def _round_up(x, m):
    return (x + m - 1) // m * m


# ---------------------------------------------------------------------------
# Kernel 1: fused k/v projection (two 1x1 convs as a single matmul).
# ---------------------------------------------------------------------------
def _make_kv_kernel(c8p, mxu_dtype):
    def kernel(x_ref, w_ref, b_ref, k_ref, v_ref):
        x = x_ref[0].astype(mxu_dtype)                 # (blk, C)
        w = w_ref[...]                                 # (C, C8p + C), mxu_dtype
        kv = jnp.dot(x, w, preferred_element_type=jnp.float32) + b_ref[...]
        # Static, 128-lane-aligned slices of the fused result.
        k_ref[0] = kv[:, :c8p].astype(k_ref.dtype)
        v_ref[0] = kv[:, c8p:].astype(v_ref.dtype)
    return kernel


# ---------------------------------------------------------------------------
# Kernel 2: flash attention with VMEM-resident K/V + fused q-proj + residual.
# ---------------------------------------------------------------------------
def _make_flash_kernel(n_valid, blk_k, n_k_tiles, needs_mask, mxu_dtype):
    def kernel(x_ref, k_ref, v_ref, wq_ref, bq_ref, gamma_ref, o_ref,
               m_sc, l_sc, acc_sc):
        x = x_ref[0]                                   # (blk_q, C), f32
        # q projection fused here (x tile already resident for the residual).
        q = jnp.dot(x.astype(mxu_dtype), wq_ref[...],
                    preferred_element_type=jnp.float32) + bq_ref[...]
        q = q.astype(mxu_dtype)                        # (blk_q, C8p)

        m_sc[...] = jnp.full_like(m_sc, -jnp.inf)
        l_sc[...] = jnp.zeros_like(l_sc)
        acc_sc[...] = jnp.zeros_like(acc_sc)

        def body(j, carry):
            off = pl.multiple_of(j * blk_k, blk_k)
            k_t = k_ref[pl.ds(off, blk_k), :]          # (blk_k, C8p)
            v_t = v_ref[pl.ds(off, blk_k), :]          # (blk_k, C)

            # energy[i, j] = q_i . k_j : contract last dims (no explicit k.T).
            s = lax.dot_general(q, k_t, (((1,), (1,)), ((), ())),
                                preferred_element_type=jnp.float32)

            if needs_mask:  # key positions beyond the real N are padding
                kpos = off + lax.broadcasted_iota(jnp.int32, s.shape, 1)
                s = jnp.where(kpos < n_valid, s, -jnp.inf)
                # NOTE: the first key tile always contains >=1 valid column
                # (padding tail < blk_k), so m stays finite and alpha is never
                # NaN.  Add a jnp.where guard if blk_k is ever decoupled from
                # the padding granularity.

            # online softmax (f32 everywhere; only MXU operands are narrow)
            m_prev = m_sc[...]
            m_new = jnp.maximum(m_prev, jnp.max(s, axis=-1, keepdims=True))
            alpha = jnp.exp(m_prev - m_new)
            p = jnp.exp(s - m_new)
            l_sc[...] = alpha * l_sc[...] + jnp.sum(p, axis=-1, keepdims=True)
            acc_sc[...] = alpha * acc_sc[...] + jnp.dot(
                p.astype(v_t.dtype), v_t, preferred_element_type=jnp.float32)
            m_sc[...] = m_new
            return carry

        lax.fori_loop(0, n_k_tiles, body, 0)

        inv_l = pl.reciprocal(l_sc[...], approx=True)          # EUP slot
        o_ref[0] = (gamma_ref[0] * (acc_sc[...] * inv_l)
                    + x.astype(jnp.float32)).astype(o_ref.dtype)
    return kernel


# ---------------------------------------------------------------------------
# Wrapper (NCHW in / NCHW out, matching the PyTorch module).
# ---------------------------------------------------------------------------
def pam_pallas(x_nchw, params, *, block_n=256, mxu_dtype=jnp.bfloat16):
    """PAM forward.

    block_n:   query/key tile size along N = H*W (multiple of 128).  256 fills
               the 256-deep MXU contraction of the PV matmul on v6e/v7x; use
               128 on v5e if desired.
    mxu_dtype: operand dtype for the MXU matmuls and for the k/v intermediates
               (default bf16).  Accumulation and softmax stay f32.  Pass
               jnp.float32 for a bit-tighter (but slower) path.
    """
    assert block_n % 128 == 0
    wq, bq, wk, bk, wv, bv, gamma = params
    B, C, H, W = x_nchw.shape
    N = H * W
    C8 = wq.shape[0]
    C8p = _round_up(C8, 128)          # pad q/k channels to MXU lane width
    dt = x_nchw.dtype

    blk = min(block_n, _round_up(N, 128))
    Np = _round_up(N, blk)
    needs_mask = Np != N
    n_tiles = Np // blk               # query tiles (pass-1 & pass-2 grid)
    n_k_tiles = Np // blk             # key tiles iterated inside pass-2 kernel

    # NCHW -> (B, N, C) channels-last, padded along N to a tile multiple.
    # TODO(synk): accept a (B, N, C) input directly to avoid this extra
    # HBM read+write of x done by XLA outside the kernels.
    x_flat = jnp.transpose(x_nchw, (0, 2, 3, 1)).reshape(B, N, C)
    x_pad = jnp.pad(x_flat, ((0, 0), (0, Np - N), (0, 0)))

    # 1x1-conv weights (out, in, 1, 1) -> (in, out); zero-pad q/k out-channels
    # to C8p (padded columns stay exactly zero -> no effect on the energy).
    f32 = jnp.float32
    wq2 = wq.reshape(C8, C).T.astype(f32)
    wk2 = wk.reshape(C8, C).T.astype(f32)
    wv2 = wv.reshape(C, C).T.astype(f32)

    wq_pad = jnp.zeros((C, C8p), f32).at[:, :C8].set(wq2).astype(mxu_dtype)
    bq_pad = jnp.zeros((1, C8p), f32).at[0, :C8].set(bq.astype(f32))

    wk_pad = jnp.zeros((C, C8p), f32).at[:, :C8].set(wk2)
    bk_pad = jnp.zeros((C8p,), f32).at[:C8].set(bk.astype(f32))
    Dkv = C8p + C
    w_kv = jnp.concatenate([wk_pad, wv2], axis=1).astype(mxu_dtype)  # (C, Dkv)
    b_kv = jnp.concatenate([bk_pad, bv.astype(f32)]).reshape(1, Dkv)

    gamma_smem = gamma.reshape(1).astype(f32)

    kv_dtype = mxu_dtype
    kv_isz = jnp.dtype(kv_dtype).itemsize
    x_isz = jnp.dtype(dt).itemsize

    # ---- pass 1: fused k/v projections, tiled over (batch, N-tile) ---------
    cost1 = pl.CostEstimate(
        flops=2 * B * Np * C * Dkv,
        transcendentals=0,
        bytes_accessed=B * Np * C * x_isz + B * Np * Dkv * kv_isz
                       + (C + 1) * Dkv * kv_isz)
    k, v = pl.pallas_call(
        _make_kv_kernel(C8p, mxu_dtype),
        grid=(B, n_tiles),
        in_specs=[
            pl.BlockSpec((1, blk, C), lambda b, n: (b, n, 0)),   # x tile
            pl.BlockSpec((C, Dkv), lambda b, n: (0, 0)),         # fused W (k|v)
            pl.BlockSpec((1, Dkv), lambda b, n: (0, 0)),         # fused bias
        ],
        out_specs=[
            pl.BlockSpec((1, blk, C8p), lambda b, n: (b, n, 0)),
            pl.BlockSpec((1, blk, C), lambda b, n: (b, n, 0)),
        ],
        out_shape=[
            jax.ShapeDtypeStruct((B, Np, C8p), kv_dtype),        # k (bf16)
            jax.ShapeDtypeStruct((B, Np, C), kv_dtype),          # v (bf16)
        ],
        compiler_params=pltpu.CompilerParams(
            dimension_semantics=("parallel", "parallel")),
        cost_estimate=cost1,
    )(x_pad, w_kv, b_kv)

    # ---- pass 2: flash attention with resident K/V + gamma residual --------
    # VMEM budget: resident K+V (double-buffered by the pipeline) + x/out
    # tiles + scratch; capped at 64 MiB so it stays within v7x physical VMEM.
    resident_bytes = 2 * Np * (C8p + C) * kv_isz
    tile_bytes = 2 * 2 * blk * C * x_isz
    scratch_bytes = blk * (C + 2) * 4
    vmem_limit = min(64 * 1024 * 1024,
                     max(32 * 1024 * 1024,
                         int(1.5 * (resident_bytes + tile_bytes + scratch_bytes))))

    cost2 = pl.CostEstimate(
        flops=2 * B * Np * C * C8p + 2 * B * Np * Np * (C8p + C),
        transcendentals=B * Np * Np,
        bytes_accessed=2 * B * Np * C * x_isz + B * Np * (C8p + C) * kv_isz)

    out_pad = pl.pallas_call(
        _make_flash_kernel(N, blk, n_k_tiles, needs_mask, mxu_dtype),
        grid=(B, n_tiles),
        in_specs=[
            pl.BlockSpec((1, blk, C), lambda b, qi: (b, qi, 0)),      # x (q+res)
            pl.BlockSpec((None, Np, C8p), lambda b, qi: (b, 0, 0)),   # K resident
            pl.BlockSpec((None, Np, C), lambda b, qi: (b, 0, 0)),     # V resident
            pl.BlockSpec((C, C8p), lambda b, qi: (0, 0)),             # Wq (padded)
            pl.BlockSpec((1, C8p), lambda b, qi: (0, 0)),             # bq (padded)
            pl.BlockSpec(memory_space=pltpu.MemorySpace.SMEM),        # gamma
        ],
        out_specs=pl.BlockSpec((1, blk, C), lambda b, qi: (b, qi, 0)),
        out_shape=jax.ShapeDtypeStruct((B, Np, C), dt),
        scratch_shapes=[
            pltpu.VMEM((blk, 1), jnp.float32),   # running max m
            pltpu.VMEM((blk, 1), jnp.float32),   # running denom l
            pltpu.VMEM((blk, C), jnp.float32),   # output accumulator
        ],
        compiler_params=pltpu.CompilerParams(
            dimension_semantics=("parallel", "parallel"),
            vmem_limit_bytes=vmem_limit),
        cost_estimate=cost2,
    )(x_pad, k, v, wq_pad, bq_pad, gamma_smem)

    out = out_pad[:, :N, :].reshape(B, H, W, C)
    return jnp.transpose(out, (0, 3, 1, 2))


# ---------------------------------------------------------------------------
# Pure-JAX reference mirroring the PyTorch forward (NCHW).
# ---------------------------------------------------------------------------
def pam_reference(x, params):
    wq, bq, wk, bk, wv, bv, gamma = params
    B, C, H, W = x.shape
    N = H * W

    def conv1x1(inp, w, b):
        return jnp.einsum('bchw,oc->bohw', inp, w[:, :, 0, 0]) + b[None, :, None, None]

    q = conv1x1(x, wq, bq).reshape(B, -1, N).transpose(0, 2, 1)   # (B, N, C8)
    k = conv1x1(x, wk, bk).reshape(B, -1, N)                      # (B, C8, N)
    energy = jnp.einsum('bnc,bcm->bnm', q, k)                     # (B, N, N)
    att = jax.nn.softmax(energy, axis=-1)
    v = conv1x1(x, wv, bv).reshape(B, -1, N)                      # (B, C, N)
    out = jnp.einsum('bcn,bmn->bcm', v, att)                      # (B, C, N)
    return gamma[0] * out.reshape(B, C, H, W) + x


def init_params(key, in_dim):
    c8 = in_dim // 8
    k = jax.random.split(key, 6)
    scale = 0.1
    wq = scale * jax.random.normal(k[0], (c8, in_dim, 1, 1), jnp.float32)
    bq = scale * jax.random.normal(k[1], (c8,), jnp.float32)
    wk = scale * jax.random.normal(k[2], (c8, in_dim, 1, 1), jnp.float32)
    bk = scale * jax.random.normal(k[3], (c8,), jnp.float32)
    wv = scale * jax.random.normal(k[4], (in_dim, in_dim, 1, 1), jnp.float32)
    bv = scale * jax.random.normal(k[5], (in_dim,), jnp.float32)
    # nn.Parameter(torch.zeros(1)) in __init__; non-zero here so the attention
    # path actually contributes to the tested output.
    gamma = jnp.full((1,), 0.5, jnp.float32)
    return (wq, bq, wk, bk, wv, bv, gamma)


if __name__ == "__main__":
    key = jax.random.PRNGKey(0)

    def run_case(B, C, H, W, k):
        kx, kp = jax.random.split(k)
        x = jax.random.normal(kx, (B, C, H, W), jnp.float32)
        params = init_params(kp, C)
        ref = jax.block_until_ready(pam_reference(x, params))

        # f32 MXU operands + multi-tile online-softmax path: tight check
        # (approx reciprocal is the only slack).
        out = jax.block_until_ready(
            pam_pallas(x, params, block_n=128, mxu_dtype=jnp.float32))
        assert out.shape == (B, C, H, W)
        err = float(jnp.max(jnp.abs(out - ref)))
        assert err < 5e-3, f"f32 path mismatch: max abs err = {err}"

        # Default path (bf16 MXU operands / bf16 k,v intermediates,
        # f32 accumulation): looser check.
        out_bf = jax.block_until_ready(pam_pallas(x, params))
        err_bf = float(jnp.max(jnp.abs(out_bf - ref)))
        assert err_bf < 5e-2, f"bf16 path mismatch: max abs err = {err_bf}"

    k1, k2 = jax.random.split(key)
    # N = 256 -> with block_n=128: 2 query tiles x 2 key tiles of the
    # resident-K/V online-softmax loop; with the default block_n=256: 1 tile.
    run_case(2, 16, 16, 16, k1)
    # N = 100 -> padded to 128: exercises the key-padding mask path.
    run_case(2, 16, 10, 10, k2)

    print("KERNEL_OK")
</pallas_src>

<mosaic_0001>
module attributes {stable_mosaic.version = 11 : i64} {
  func.func @kernel(%arg0: i32, %arg1: i32, %arg2: memref<1x128x16xf32, #tpu.memory_space<vmem>>, %arg3: memref<16x144xf32, #tpu.memory_space<vmem>>, %arg4: memref<1x144xf32, #tpu.memory_space<vmem>>, %arg5: memref<1x128x128xf32, #tpu.memory_space<vmem>>, %arg6: memref<1x128x16xf32, #tpu.memory_space<vmem>>) attributes {dimension_semantics = [#tpu.dimension_semantics<parallel>, #tpu.dimension_semantics<parallel>], iteration_bounds = array<i64: 2, 2>, scalar_prefetch = 0 : i64, scratch_operands = 0 : i64, tpu.core_type = #tpu.core_type<tc>, window_params = [{transform_indices = @transform_0, window_bounds = array<i64: 1, 128, 16>}, {pipeline_mode = #tpu.pipeline_mode<synchronous>, transform_indices = @transform_1, window_bounds = array<i64: 16, 144>}, {pipeline_mode = #tpu.pipeline_mode<synchronous>, transform_indices = @transform_2, window_bounds = array<i64: 1, 144>}, {transform_indices = @transform_3, window_bounds = array<i64: 1, 128, 128>}, {transform_indices = @transform_4, window_bounds = array<i64: 1, 128, 16>}]} {
    %c0 = arith.constant 0 : index
    %c0_0 = arith.constant 0 : index
    %c0_1 = arith.constant 0 : index
    %0 = vector.load %arg2[%c0, %c0_0, %c0_1] : memref<1x128x16xf32, #tpu.memory_space<vmem>>, vector<1x128x16xf32>
    %1 = vector.shape_cast %0 : vector<1x128x16xf32> to vector<128x16xf32>
    %c0_2 = arith.constant 0 : index
    %c0_3 = arith.constant 0 : index
    %2 = vector.load %arg3[%c0_2, %c0_3] : memref<16x144xf32, #tpu.memory_space<vmem>>, vector<16x144xf32>
    %cst = arith.constant dense<0.000000e+00> : vector<128x144xf32>
    %3 = tpu.matmul %1, %2, %cst {dimension_numbers = #tpu.dot_dimension_numbers<[1], [0], [0], [1], [0, 0, 1, 1], [], []>} : vector<128x16xf32>, vector<16x144xf32>, vector<128x144xf32> -> vector<128x144xf32>
    %c0_4 = arith.constant 0 : index
    %c0_5 = arith.constant 0 : index
    %4 = vector.load %arg4[%c0_4, %c0_5] : memref<1x144xf32, #tpu.memory_space<vmem>>, vector<1x144xf32>
    %5 = vector.broadcast %4 : vector<1x144xf32> to vector<128x144xf32>
    %6 = arith.addf %3, %5 : vector<128x144xf32>
    %7 = vector.extract_strided_slice %6 {offsets = [0, 0], sizes = [128, 128], strides = [1, 1]} : vector<128x144xf32> to vector<128x128xf32>
    %c0_6 = arith.constant 0 : index
    %c0_7 = arith.constant 0 : index
    %c0_8 = arith.constant 0 : index
    %8 = vector.load %arg5[%c0_6, %c0_7, %c0_8] : memref<1x128x128xf32, #tpu.memory_space<vmem>>, vector<1x128x128xf32>
    %9 = vector.shape_cast %8 : vector<1x128x128xf32> to vector<128x128xf32>
    %10 = vector.shape_cast %7 : vector<128x128xf32> to vector<1x128x128xf32>
    tpu.vector_store %arg5[%c0_6, %c0_7, %c0_8], %10 {strides = array<i32>} : memref<1x128x128xf32, #tpu.memory_space<vmem>>, vector<1x128x128xf32>,
    %11 = vector.extract_strided_slice %6 {offsets = [0, 128], sizes = [128, 16], strides = [1, 1]} : vector<128x144xf32> to vector<128x16xf32>
    %c0_9 = arith.constant 0 : index
    %c0_10 = arith.constant 0 : index
    %c0_11 = arith.constant 0 : index
    %12 = vector.load %arg6[%c0_9, %c0_10, %c0_11] : memref<1x128x16xf32, #tpu.memory_space<vmem>>, vector<1x128x16xf32>
    %13 = vector.shape_cast %12 : vector<1x128x16xf32> to vector<128x16xf32>
    %14 = vector.shape_cast %11 : vector<128x16xf32> to vector<1x128x16xf32>
    tpu.vector_store %arg6[%c0_9, %c0_10, %c0_11], %14 {strides = array<i32>} : memref<1x128x16xf32, #tpu.memory_space<vmem>>, vector<1x128x16xf32>,
    return
  }
  func.func @transform_0(%arg0: i32, %arg1: i32) -> (i32, i32, i32) {
    %c0_i32 = arith.constant 0 : i32
    %c0_i32_0 = arith.constant 0 : i32
    return %arg0, %arg1, %c0_i32 : i32, i32, i32
  }
  func.func @transform_1(%arg0: i32, %arg1: i32) -> (i32, i32) {
    %c0_i32 = arith.constant 0 : i32
    %c0_i32_0 = arith.constant 0 : i32
    %c0_i32_1 = arith.constant 0 : i32
    return %c0_i32, %c0_i32_0 : i32, i32
  }
  func.func @transform_2(%arg0: i32, %arg1: i32) -> (i32, i32) {
    %c0_i32 = arith.constant 0 : i32
    %c0_i32_0 = arith.constant 0 : i32
    %c0_i32_1 = arith.constant 0 : i32
    return %c0_i32, %c0_i32_0 : i32, i32
  }
  func.func @transform_3(%arg0: i32, %arg1: i32) -> (i32, i32, i32) {
    %c0_i32 = arith.constant 0 : i32
    %c0_i32_0 = arith.constant 0 : i32
    return %arg0, %arg1, %c0_i32 : i32, i32, i32
  }
  func.func @transform_4(%arg0: i32, %arg1: i32) -> (i32, i32, i32) {
    %c0_i32 = arith.constant 0 : i32
    %c0_i32_0 = arith.constant 0 : i32
    return %arg0, %arg1, %c0_i32 : i32, i32, i32
  }
}

</mosaic_0001>

<llo_original>
// kernel: tpu_custom_call.1
$region0: #{tpu_custom_call.1}
  #allocation0 [shape = 'u32[]', space=smem, size = 0x4, offset = 0x4, fixed_abs, tag = 'smem constant byte address 0x4 - core index']
  #allocation1 [shape = 'u32[144,128]{1,0:T(1,128)}', space=vmem, size = 0x12000, scoped, tag = 'internal scratch']
  %s0 = inlined_call_operand.vmem [shape: f32[2,256,16], index: 0, kind: input, shape index: {}]
  %s1 = inlined_call_operand.vmem [shape: f32[16,144], index: 1, kind: input, shape index: {}]
  %s2 = inlined_call_operand.vmem [shape: f32[1,144], index: 2, kind: input, shape index: {}]
  %s3 = inlined_call_operand.hbm [shape: f32[2,256,128], index: 3, kind: output, shape index: {0}]
  %s4 = inlined_call_operand.vmem [shape: f32[2,256,16], index: 4, kind: output, shape index: {1}]
  %5 = xla_tuple %s3, %s4
  %s6 = sld [smem:[#allocation0]]
  $region53: #{tpu_custom_call.1} parent=0
    _
  %s8 = ssub.s32 1, %s6
  %s9 = scalar_select 0, %s8, %s6
  $region1: #{tpu_custom_call.1} parent=0
    #allocation2 [shape = 'u8[131072]{0}', space=vmem, size = 0x20000, scoped, tag = 'output window, operand 0']
    #allocation3 [shape = 's32[2]{0}', space=sflag, size = 0x8, scoped, tag = 'scoped memory for tpu_custom_call.1']
    %10 = vsyncpa [#allocation3], 0
    %s11 = scalar_lea.sflag [#allocation3], 1
    %12 = vsyncpa %s11, 0
    loop: start=0, step=1, limit=6
    $region2: #{tpu_custom_call.1} parent=1 // loop_pre_header
      _
    $region3: #{tpu_custom_call.1} parent=1 // loop_header
      %s14 = sphi 0, %s18
      %p15 = scmp.ge.s32.totalorder %s14, 6
      %s21 = sphi 0, %s33
      %s22 = sphi 0, %s29
      %s23 = sphi 0, %s21
      %s24 = sphi 0, %s22
      %s25 = sphi 0, %s23
      %s26 = sphi 0, %s24
      %s38 = sphi 0, %s40
      %s41 = sphi 0, %s38
      %s42 = sphi 0, %s41
      %s58 = sphi 0, %s42
      %s62 = sphi 0, %s62
      %s64 = sphi 0, %s62
      %s65 = sphi 0, %s64
      %s79 = sphi 0, %s65
      %s83 = sphi 0, %s83
      %s85 = sphi 0, %s83
      %s86 = sphi 0, %s85
      %s100 = sphi 0, %s86
      %s108 = sphi 0, %s110
      %s111 = sphi 0, %s108
      %s112 = sphi 0, %s111
      %s128 = sphi 0, %s112
      %s136 = sphi 0, %s138
      %s139 = sphi 0, %s136
      %s140 = sphi 0, %s139
      %s156 = sphi 0, %s140
    $region4: #{tpu_custom_call.1} parent=1 // loop_header_branch
      %17 = sbr.rel (%p15) target = $region8
    $region5: #{tpu_custom_call.1} parent=1 // loop_body
      %s19 = ssub.s32 %s14, 1
      %s20 = ssub.s32 %s14, 2
      %s27 = sadd.s32 1, %s22
      %p28 = scmp.ge.s32.totalorder %s27, 2
      %s29 = scalar_select %p28, 0, %s27
      %s30 = sadd.s32 1, %s21
      %s31 = scalar_select %p28, %s30, %s21
      %p32 = scmp.ge.s32.totalorder %s31, 2
      %s33 = scalar_select %p32, 0, %s31
      %s34 = ssub.s32 %s21, %s33
      %s35 = ssub.s32 %s22, %s29
      %s36 = sor.u32 %s34, %s35
      %p37 = scmp.eq.s32.totalorder %s36, 0
      %s39 = sadd.s32 %s38, 1
      %s40 = scalar_select %p37, %s38, %s39
      %p43 = pneg %p37
      %p44 = scmp.eq.s32.totalorder %s14, 3
      %p45 = por %p43, %p44
      %p46 = scmp.ne.s32.totalorder %s38, %s41
      %p47 = scmp.eq.s32.totalorder %s14, 0
      %p48 = por %p46, %p47
      %p49 = scmp.ne.s32.totalorder %s38, %s41
      %p50 = scmp.eq.s32.totalorder %s19, 3
      %p51 = por %p49, %p50
      %p52 = scmp.ne.s32.totalorder %s41, %s42
      %p53 = scmp.eq.s32.totalorder %s19, 0
      %p54 = por %p52, %p53
      %p55 = scmp.ne.s32.totalorder %s41, %s42
      %p56 = scmp.eq.s32.totalorder %s20, 3
      %p57 = por %p55, %p56
      %p59 = scmp.ne.s32.totalorder %s42, %s58
      %p60 = scmp.eq.s32.totalorder %s20, 0
      %p61 = por %p59, %p60
      %s63 = sadd.s32 %s62, 1
      %p66 = scmp.eq.s32.totalorder %s14, 3
      %p67 = scmp.ne.s32.totalorder %s62, %s64
      %p68 = scmp.eq.s32.totalorder %s14, 0
      %p69 = por %p67, %p68
      %p70 = scmp.ne.s32.totalorder %s62, %s64
      %p71 = scmp.eq.s32.totalorder %s19, 3
      %p72 = por %p70, %p71
      %p73 = scmp.ne.s32.totalorder %s64, %s65
      %p74 = scmp.eq.s32.totalorder %s19, 0
      %p75 = por %p73, %p74
      %p76 = scmp.ne.s32.totalorder %s64, %s65
      %p77 = scmp.eq.s32.totalorder %s20, 3
      %p78 = por %p76, %p77
      %p80 = scmp.ne.s32.totalorder %s65, %s79
      %p81 = scmp.eq.s32.totalorder %s20, 0
      %p82 = por %p80, %p81
      %s84 = sadd.s32 %s83, 1
      %p87 = scmp.eq.s32.totalorder %s14, 3
      %p88 = scmp.ne.s32.totalorder %s83, %s85
      %p89 = scmp.eq.s32.totalorder %s14, 0
      %p90 = por %p88, %p89
      %p91 = scmp.ne.s32.totalorder %s83, %s85
      %p92 = scmp.eq.s32.totalorder %s19, 3
      %p93 = por %p91, %p92
      %p94 = scmp.ne.s32.totalorder %s85, %s86
      %p95 = scmp.eq.s32.totalorder %s19, 0
      %p96 = por %p94, %p95
      %p97 = scmp.ne.s32.totalorder %s85, %s86
      %p98 = scmp.eq.s32.totalorder %s20, 3
      %p99 = por %p97, %p98
      %p101 = scmp.ne.s32.totalorder %s86, %s100
      %p102 = scmp.eq.s32.totalorder %s20, 0
      %p103 = por %p101, %p102
      %s104 = ssub.s32 %s21, %s33
      %s105 = ssub.s32 %s22, %s29
      %s106 = sor.u32 %s104, %s105
      %p107 = scmp.eq.s32.totalorder %s106, 0
      %s109 = sadd.s32 %s108, 1
      %s110 = scalar_select %p107, %s108, %s109
      %p113 = pneg %p107
      %p114 = scmp.eq.s32.totalorder %s14, 3
      %p115 = por %p113, %p114
      %p116 = scmp.ne.s32.totalorder %s108, %s111
      %p117 = scmp.eq.s32.totalorder %s14, 0
      %p118 = por %p116, %p117
      %p119 = scmp.ne.s32.totalorder %s108, %s111
      %p120 = scmp.eq.s32.totalorder %s19, 3
      %p121 = por %p119, %p120
      %p122 = scmp.ne.s32.totalorder %s111, %s112
      %p123 = scmp.eq.s32.totalorder %s19, 0
      %p124 = por %p122, %p123
      %p125 = scmp.ne.s32.totalorder %s111, %s112
      %p126 = scmp.eq.s32.totalorder %s20, 3
      %p127 = por %p125, %p126
      %p129 = scmp.ne.s32.totalorder %s112, %s128
      %p130 = scmp.eq.s32.totalorder %s20, 0
      %p131 = por %p129, %p130
      %s132 = ssub.s32 %s21, %s33
      %s133 = ssub.s32 %s22, %s29
      %s134 = sor.u32 %s132, %s133
      %p135 = scmp.eq.s32.totalorder %s134, 0
      %s137 = sadd.s32 %s136, 1
      %s138 = scalar_select %p135, %s136, %s137
      %p141 = pneg %p135
      %p142 = scmp.eq.s32.totalorder %s14, 3
      %p143 = por %p141, %p142
      %p144 = scmp.ne.s32.totalorder %s136, %s139
      %p145 = scmp.eq.s32.totalorder %s14, 0
      %p146 = por %p144, %p145
      %p147 = scmp.ne.s32.totalorder %s136, %s139
      %p148 = scmp.eq.s32.totalorder %s19, 3
      %p149 = por %p147, %p148
      %p150 = scmp.ne.s32.totalorder %s139, %s140
      %p151 = scmp.eq.s32.totalorder %s19, 0
      %p152 = por %p150, %p151
      %p153 = scmp.ne.s32.totalorder %s139, %s140
      %p154 = scmp.eq.s32.totalorder %s20, 3
      %p155 = por %p153, %p154
      %p157 = scmp.ne.s32.totalorder %s140, %s156
      %p158 = scmp.eq.s32.totalorder %s20, 0
      %p159 = por %p157, %p158
      %p160 = scmp.le.s32.totalorder 1, %s14
      %p161 = scmp.lt.s32.totalorder %s14, 5
      %p162 = pnand %p160, %p161
      %p163 = pneg %p162
      // Predicated region
      $region9: #{tpu_custom_call.1} parent=5 // pred_check
        _
      $region10: #{tpu_custom_call.1} parent=5 // pred_check_branch
        %165 = sbr.rel (%p162) target = $region12
      $region11: #{tpu_custom_call.1} parent=5 // pred_region
        %s166 = ssub.s32 %s14, 1
        // Predicated region
        $region13: #{tpu_custom_call.1} parent=11 // pred_check
          %p167 = pneg %p75
        $region14: #{tpu_custom_call.1} parent=11 // pred_check_branch
          %169 = sbr.rel (%p167) target = $region16
        $region15: #{tpu_custom_call.1} parent=11 // pred_region
          _
        $region16: #{tpu_custom_call.1} parent=11 // pred_fallthru
          _
        // Predicated region
        $region17: #{tpu_custom_call.1} parent=11 // pred_check
          %p170 = pneg %p96
        $region18: #{tpu_custom_call.1} parent=11 // pred_check_branch
          %172 = sbr.rel (%p170) target = $region20
        $region19: #{tpu_custom_call.1} parent=11 // pred_region
          _
        $region20: #{tpu_custom_call.1} parent=11 // pred_fallthru
          _
      $region12: #{tpu_custom_call.1} parent=5 // pred_fallthru
        _
      %p173 = scmp.lt.s32.totalorder %s14, 4
      // Predicated region
      $region21: #{tpu_custom_call.1} parent=5 // pred_check
        %p174 = pneg %p173
      $region22: #{tpu_custom_call.1} parent=5 // pred_check_branch
        %176 = sbr.rel (%p174) target = $region24
      $region23: #{tpu_custom_call.1} parent=5 // pred_region
        // Predicated region
        $region25: #{tpu_custom_call.1} parent=23 // pred_check
          %p177 = pneg %p48
        $region26: #{tpu_custom_call.1} parent=23 // pred_check_branch
          %179 = sbr.rel (%p177) target = $region28
        $region27: #{tpu_custom_call.1} parent=23 // pred_region
          %s180 = smul.u32 16, %s22
          %p181 = scmp.lt.s32.totalorder %s21, 1
          %s182 = scalar_select %p181, %s21, 1
          %p183 = scmp.lt.s32.totalorder %s180, 31
          %s184 = scalar_select %p183, %s180, 31
          %s185 = smul.addr %s182, 32
          %s186 = sadd.s32 %s184, %s185
          %s187 = smul.addr %s186, 8
          %s188 = scalar_lea.vmem %s0, %s187
          %s189 = smul.u32 16, %s22
        $region28: #{tpu_custom_call.1} parent=23 // pred_fallthru
          _
      $region24: #{tpu_custom_call.1} parent=5 // pred_fallthru
        _
      %p190 = scmp.le.s32.totalorder 1, %s14
      %p191 = scmp.lt.s32.totalorder %s14, 5
      %p192 = pnand %p190, %p191
      %p193 = pneg %p192
      // Predicated region
      $region29: #{tpu_custom_call.1} parent=5 // pred_check
        _
      $region30: #{tpu_custom_call.1} parent=5 // pred_check_branch
        %195 = sbr.rel (%p192) target = $region32
      $region31: #{tpu_custom_call.1} parent=5 // pred_region
        %s196 = ssub.s32 %s14, 1
        %s197 = smul.u32 16, %s24
        %p198 = scmp.lt.s32.totalorder %s23, 1
        %s199 = scalar_select %p198, %s23, 1
        %p200 = scmp.lt.s32.totalorder %s197, 31
        %s201 = scalar_select %p200, %s197, 31
        %s202 = smul.addr %s199, 32
        %s203 = sadd.s32 %s201, %s202
        %s204 = smul.addr %s203, 8
        %s205 = scalar_lea.vmem %s0, %s204
        %p206 = pneg %p54
        %p207 = pneg %p51
        %p208 = pneg %p75
        %p209 = pneg %p72
        %p210 = pneg %p96
        %p211 = pneg %p93
        %p212 = pneg %p124
        %p213 = pneg %p121
        %s214 = sand.u32 %s111, 1
        %s215 = scalar_lea.sflag [#allocation3], %s214
        %s216 = sand.u32 %s111, 1
        %s217 = smul.addr %s216, 128
        %s218 = scalar_lea.vmem [#allocation2], %s217
        %p219 = pneg %p152
        %p220 = pneg %p149
        %s221 = smul.u32 16, %s24
        %p222 = scmp.lt.s32.totalorder %s23, 1
        %s223 = scalar_select %p222, %s23, 1
        %p224 = scmp.lt.s32.totalorder %s221, 31
        %s225 = scalar_select %p224, %s221, 31
        %s226 = smul.addr %s223, 32
        %s227 = sadd.s32 %s225, %s226
        %s228 = smul.addr %s227, 8
        %s229 = scalar_lea.vmem %s4, %s228
        %s230 = smul.u32 16, %s24
        %p231 = scmp.lt.s32.totalorder %s23, 1
        %s232 = scalar_select %p231, %s23, 1
        %p233 = scmp.lt.s32.totalorder %s230, 31
        %s234 = scalar_select %p233, %s230, 31
        %s235 = smul.addr %s232, 32
        %s236 = sadd.s32 %s234, %s235
        %s237 = smul.addr %s236, 8
        %s238 = scalar_lea.vmem %s0, %s237
        %s239 = smul.u32 16, %s24
        %s240 = smul.u32 16, %s24
        %s241 = smul.u32 16, %s24
        %p242 = scmp.lt.s32.totalorder %s23, 1
        %s243 = scalar_select %p242, %s23, 1
        %p244 = scmp.lt.s32.totalorder %s241, 31
        %s245 = scalar_select %p244, %s241, 31
        %s246 = smul.addr %s243, 32
        %s247 = sadd.s32 %s245, %s246
        %s248 = smul.addr %s247, 8
        %s249 = scalar_lea.vmem %s4, %s248
        %s250 = smul.u32 16, %s24
        %v251 = vld [vmem:[%s238] sm:$0xff]
        %v252 = vld [vmem:[%s238 + $0x8] sm:$0xff]
        %v253 = vld [vmem:[%s238 + $0x10] sm:$0xff]
        %v254 = vld [vmem:[%s238 + $0x18] sm:$0xff]
        %v255 = vld [vmem:[%s238 + $0x20] sm:$0xff]
        %v256 = vld [vmem:[%s238 + $0x28] sm:$0xff]
        %v257 = vld [vmem:[%s238 + $0x30] sm:$0xff]
        %v258 = vld [vmem:[%s238 + $0x38] sm:$0xff]
        %v259 = vld [vmem:[%s238 + $0x40] sm:$0xff]
        %v260 = vld [vmem:[%s238 + $0x48] sm:$0xff]
        %v261 = vld [vmem:[%s238 + $0x50] sm:$0xff]
        %v262 = vld [vmem:[%s238 + $0x58] sm:$0xff]
        %v263 = vld [vmem:[%s238 + $0x60] sm:$0xff]
        %v264 = vld [vmem:[%s238 + $0x68] sm:$0xff]
        %v265 = vld [vmem:[%s238 + $0x70] sm:$0xff]
        %v266 = vld [vmem:[%s238 + $0x78] sm:$0xff]
        %v267 = vld [vmem:[%s1] sm:$0xff]
        %v268 = vld [vmem:[%s1 + $0x8] sm:$0xff]
        %v269 = vld [vmem:[%s1 + $0x10] sm:$0xff]
        %v270 = vld [vmem:[%s1 + $0x18] sm:$0xff]
        %v271 = vld [vmem:[%s2] sm:$0x3]
        %v273 = vlaneseq
        %v274 = vshrl.u32 %v273, 7
        %v275 = vsub.s32 0, %v274
        %v276 = vrot.slane %v271, %v275
        %v277 = vlaneseq
        %v278 = vshrl.u32 %v277, 7
        %v279 = vsub.s32 1, %v278
        %v280 = vrot.slane %v271, %v279
        %vm283 = vcmask 130048
        %v285 = vsel %vm283, %v251, 0
        %v288 = vsel %vm283, %v252, 0
        %v291 = vsel %vm283, %v253, 0
        %v294 = vsel %vm283, %v254, 0
        %v297 = vsel %vm283, %v255, 0
        %v300 = vsel %vm283, %v256, 0
        %v303 = vsel %vm283, %v257, 0
        %v306 = vsel %vm283, %v258, 0
        %v309 = vsel %vm283, %v259, 0
        %v312 = vsel %vm283, %v260, 0
        %v315 = vsel %vm283, %v261, 0
        %v318 = vsel %vm283, %v262, 0
        %v321 = vsel %vm283, %v263, 0
        %v324 = vsel %vm283, %v264, 0
        %v327 = vsel %vm283, %v265, 0
        %v330 = vsel %vm283, %v266, 0
        %332 = vmatprep.subr.mxu0 0.0
        %333 = vmatpush1.msra.mxu0 0.0
        %334 = vmatprep.subr.mxu0 0.0
        %335 = vmatpush1.msra.mxu0 0.0
        %336 = vmatprep.subr.mxu0 0.0
        %337 = vmatpush1.msra.mxu0 0.0
        %338 = vmatprep.subr.mxu0 0.0
        %339 = vmatpush1.msra.mxu0 0.0
        %340 = vmatprep.subr.mxu0 0.0
        %341 = vmatpush1.msra.mxu0 0.0
        %342 = vmatprep.subr.mxu0 0.0
        %343 = vmatpush1.msra.mxu0 0.0
        %344 = vmatprep.subr.mxu0 0.0
        %345 = vmatpush1.msra.mxu0 0.0
        %346 = vmatprep.subr.mxu0 0.0
        %347 = vmatpush1.msra.mxu0 0.0
        %348 = vmatprep.subr.mxu0 0.0
        %349 = vmatpush1.msra.mxu0 0.0
        %350 = vmatprep.subr.mxu0 0.0
        %351 = vmatpush1.msra.mxu0 0.0
        %352 = vmatprep.subr.mxu0 0.0
        %353 = vmatpush1.msra.mxu0 0.0
        %354 = vmatprep.subr.mxu0 0.0
        %355 = vmatpush1.msra.mxu0 0.0
        %356 = vmatprep.subr.mxu0 0.0
        %357 = vmatpush1.msra.mxu0 0.0
        %358 = vmatprep.subr.mxu0 0.0
        %359 = vmatpush1.msra.mxu0 0.0
        %360 = vmatprep.subr.mxu0 %v270
        %361 = vmatpush1.msra.mxu0 %v269
        %362 = vmatprep.subr.mxu0 %v268
        %363 = vmatpush1.msra.mxu0 %v267
        %364 = vmatprep.subr.mxu0 0.0
        %365 = vmatpush2.msra.mxu0 0.0
        %366 = vmatprep.subr.mxu0 0.0
        %367 = vmatpush2.msra.mxu0 0.0
        %368 = vmatprep.subr.mxu0 0.0
        %369 = vmatpush2.msra.mxu0 0.0
        %370 = vmatprep.subr.mxu0 0.0
        %371 = vmatpush2.msra.mxu0 0.0
        %372 = vmatprep.subr.mxu0 0.0
        %373 = vmatpush2.msra.mxu0 0.0
        %374 = vmatprep.subr.mxu0 0.0
        %375 = vmatpush2.msra.mxu0 0.0
        %376 = vmatprep.subr.mxu0 0.0
        %377 = vmatpush2.msra.mxu0 0.0
        %378 = vmatprep.subr.mxu0 0.0
        %379 = vmatpush2.msra.mxu0 0.0
        %380 = vmatprep.subr.mxu0 0.0
        %381 = vmatpush2.msra.mxu0 0.0
        %382 = vmatprep.subr.mxu0 0.0
        %383 = vmatpush2.msra.mxu0 0.0
        %384 = vmatprep.subr.mxu0 0.0
        %385 = vmatpush2.msra.mxu0 0.0
        %386 = vmatprep.subr.mxu0 0.0
        %387 = vmatpush2.msra.mxu0 0.0
        %388 = vmatprep.subr.mxu0 0.0
        %389 = vmatpush2.msra.mxu0 0.0
        %390 = vmatprep.subr.mxu0 0.0
        %391 = vmatpush2.msra.mxu0 0.0
        %392 = vmatprep.subr.mxu0 0.0
        %393 = vmatpush2.msra.mxu0 0.0
        %394 = vmatprep.subr.mxu0 0.0
        %395 = vmatpush2.msra.mxu0 0.0
        %396 = vmatprep.mubr.f32.mxu0 0.0
        %397 = vmatmul.mubr.f32.gmra.mxu0 %v285
        %v398 = vpop.f32.mrf.mxu0
        %v399 = vadd.f32 %v276, %v398
        %v400 = vpop.f32.mrf.mxu0
        %v401 = vadd.f32 %v280, %v400
        %402 = vmatprep.mubr.f32.mxu0 0.0
        %403 = vmatmul.mubr.f32.gmra.mxu0 %v288
        %v404 = vpop.f32.mrf.mxu0
        %v405 = vadd.f32 %v276, %v404
        %v406 = vpop.f32.mrf.mxu0
        %v407 = vadd.f32 %v280, %v406
        %408 = vmatprep.mubr.f32.mxu0 0.0
        %409 = vmatmul.mubr.f32.gmra.mxu0 %v291
        %v410 = vpop.f32.mrf.mxu0
        %v411 = vadd.f32 %v276, %v410
        %v412 = vpop.f32.mrf.mxu0
        %v413 = vadd.f32 %v280, %v412
        %414 = vmatprep.mubr.f32.mxu0 0.0
        %415 = vmatmul.mubr.f32.gmra.mxu0 %v294
        %v416 = vpop.f32.mrf.mxu0
        %v417 = vadd.f32 %v276, %v416
        %v418 = vpop.f32.mrf.mxu0
        %v419 = vadd.f32 %v280, %v418
        %420 = vmatprep.mubr.f32.mxu0 0.0
        %421 = vmatmul.mubr.f32.gmra.mxu0 %v297
        %v422 = vpop.f32.mrf.mxu0
        %v423 = vadd.f32 %v276, %v422
        %v424 = vpop.f32.mrf.mxu0
        %v425 = vadd.f32 %v280, %v424
        %426 = vmatprep.mubr.f32.mxu0 0.0
        %427 = vmatmul.mubr.f32.gmra.mxu0 %v300
        %v428 = vpop.f32.mrf.mxu0
        %v429 = vadd.f32 %v276, %v428
        %v430 = vpop.f32.mrf.mxu0
        %v431 = vadd.f32 %v280, %v430
        %432 = vmatprep.mubr.f32.mxu0 0.0
        %433 = vmatmul.mubr.f32.gmra.mxu0 %v303
        %v434 = vpop.f32.mrf.mxu0
        %v435 = vadd.f32 %v276, %v434
        %v436 = vpop.f32.mrf.mxu0
        %v437 = vadd.f32 %v280, %v436
        %438 = vmatprep.mubr.f32.mxu0 0.0
        %439 = vmatmul.mubr.f32.gmra.mxu0 %v306
        %v440 = vpop.f32.mrf.mxu0
        %v441 = vadd.f32 %v276, %v440
        %v442 = vpop.f32.mrf.mxu0
        %v443 = vadd.f32 %v280, %v442
        %444 = vmatprep.mubr.f32.mxu0 0.0
        %445 = vmatmul.mubr.f32.gmra.mxu0 %v309
        %v446 = vpop.f32.mrf.mxu0
        %v447 = vadd.f32 %v276, %v446
        %v448 = vpop.f32.mrf.mxu0
        %v449 = vadd.f32 %v280, %v448
        %450 = vmatprep.mubr.f32.mxu0 0.0
        %451 = vmatmul.mubr.f32.gmra.mxu0 %v312
        %v452 = vpop.f32.mrf.mxu0
        %v453 = vadd.f32 %v276, %v452
        %v454 = vpop.f32.mrf.mxu0
        %v455 = vadd.f32 %v280, %v454
        %456 = vmatprep.mubr.f32.mxu0 0.0
        %457 = vmatmul.mubr.f32.gmra.mxu0 %v315
        %v458 = vpop.f32.mrf.mxu0
        %v459 = vadd.f32 %v276, %v458
        %v460 = vpop.f32.mrf.mxu0
        %v461 = vadd.f32 %v280, %v460
        %462 = vmatprep.mubr.f32.mxu0 0.0
        %463 = vmatmul.mubr.f32.gmra.mxu0 %v318
        %v464 = vpop.f32.mrf.mxu0
        %v465 = vadd.f32 %v276, %v464
        %v466 = vpop.f32.mrf.mxu0
        %v467 = vadd.f32 %v280, %v466
        %468 = vmatprep.mubr.f32.mxu0 0.0
        %469 = vmatmul.mubr.f32.gmra.mxu0 %v321
        %v470 = vpop.f32.mrf.mxu0
        %v471 = vadd.f32 %v276, %v470
        %v472 = vpop.f32.mrf.mxu0
        %v473 = vadd.f32 %v280, %v472
        %474 = vmatprep.mubr.f32.mxu0 0.0
        %475 = vmatmul.mubr.f32.gmra.mxu0 %v324
        %v476 = vpop.f32.mrf.mxu0
        %v477 = vadd.f32 %v276, %v476
        %v478 = vpop.f32.mrf.mxu0
        %v479 = vadd.f32 %v280, %v478
        %480 = vmatprep.mubr.f32.mxu0 0.0
        %481 = vmatmul.mubr.f32.gmra.mxu0 %v327
        %v482 = vpop.f32.mrf.mxu0
        %v483 = vadd.f32 %v276, %v482
        %v484 = vpop.f32.mrf.mxu0
        %v485 = vadd.f32 %v280, %v484
        %486 = vmatprep.mubr.f32.mxu0 0.0
        %487 = vmatmul.mubr.f32.gmra.mxu0 %v330
        %v488 = vpop.f32.mrf.mxu0
        %v489 = vadd.f32 %v276, %v488
        %v490 = vpop.f32.mrf.mxu0
        %v491 = vadd.f32 %v280, %v490
        %492 = vdwg.mxu0
        %493 = vst [vmem:[%s218] sm:$0xff] %v399
        %494 = vst [vmem:[%s218 + $0x8] sm:$0xff] %v405
        %495 = vst [vmem:[%s218 + $0x10] sm:$0xff] %v411
        %496 = vst [vmem:[%s218 + $0x18] sm:$0xff] %v417
        %497 = vst [vmem:[%s218 + $0x20] sm:$0xff] %v423
        %498 = vst [vmem:[%s218 + $0x28] sm:$0xff] %v429
        %499 = vst [vmem:[%s218 + $0x30] sm:$0xff] %v435
        %500 = vst [vmem:[%s218 + $0x38] sm:$0xff] %v441
        %501 = vst [vmem:[%s218 + $0x40] sm:$0xff] %v447
        %502 = vst [vmem:[%s218 + $0x48] sm:$0xff] %v453
        %503 = vst [vmem:[%s218 + $0x50] sm:$0xff] %v459
        %504 = vst [vmem:[%s218 + $0x58] sm:$0xff] %v465
        %505 = vst [vmem:[%s218 + $0x60] sm:$0xff] %v471
        %506 = vst [vmem:[%s218 + $0x68] sm:$0xff] %v477
        %507 = vst [vmem:[%s218 + $0x70] sm:$0xff] %v483
        %508 = vst [vmem:[%s218 + $0x78] sm:$0xff] %v489
        %509 = vst.msk [vmem:[%s249] sm:$0xff] %vm283, %v401
        %510 = vst.msk [vmem:[%s249 + $0x8] sm:$0xff] %vm283, %v407
        %511 = vst.msk [vmem:[%s249 + $0x10] sm:$0xff] %vm283, %v413
        %512 = vst.msk [vmem:[%s249 + $0x18] sm:$0xff] %vm283, %v419
        %513 = vst.msk [vmem:[%s249 + $0x20] sm:$0xff] %vm283, %v425
        %514 = vst.msk [vmem:[%s249 + $0x28] sm:$0xff] %vm283, %v431
        %515 = vst.msk [vmem:[%s249 + $0x30] sm:$0xff] %vm283, %v437
        %516 = vst.msk [vmem:[%s249 + $0x38] sm:$0xff] %vm283, %v443
        %517 = vst.msk [vmem:[%s249 + $0x40] sm:$0xff] %vm283, %v449
        %518 = vst.msk [vmem:[%s249 + $0x48] sm:$0xff] %vm283, %v455
        %519 = vst.msk [vmem:[%s249 + $0x50] sm:$0xff] %vm283, %v461
        %520 = vst.msk [vmem:[%s249 + $0x58] sm:$0xff] %vm283, %v467
        %521 = vst.msk [vmem:[%s249 + $0x60] sm:$0xff] %vm283, %v473
        %522 = vst.msk [vmem:[%s249 + $0x68] sm:$0xff] %vm283, %v479
        %523 = vst.msk [vmem:[%s249 + $0x70] sm:$0xff] %vm283, %v485
        %524 = vst.msk [vmem:[%s249 + $0x78] sm:$0xff] %vm283, %v491
        %s525 = sand.u32 %s111, 1
        %s526 = scalar_lea.sflag [#allocation3], %s525
        %s527 = sand.u32 %s111, 1
        %s528 = smul.addr %s527, 128
        %s529 = scalar_lea.vmem [#allocation2], %s528
        %s530 = smul.u32 16, %s24
        %p531 = scmp.lt.s32.totalorder %s23, 1
        %s532 = scalar_select %p531, %s23, 1
        %p533 = scmp.lt.s32.totalorder %s530, 31
        %s534 = scalar_select %p533, %s530, 31
        %s535 = smul.addr %s532, 32
        %s536 = sadd.s32 %s534, %s535
        %s537 = smul.addr %s536, 8
        %s538 = scalar_lea.vmem %s4, %s537
        // Predicated region
        $region33: #{tpu_custom_call.1} parent=31 // pred_check
          %p539 = pneg %p121
        $region34: #{tpu_custom_call.1} parent=31 // pred_check_branch
          %541 = sbr.rel (%p539) target = $region36
        $region35: #{tpu_custom_call.1} parent=31 // pred_region
          %s542 = smul.u32 16, %s24
          %s544 = ssub.s32 2048, 2048
          %545 = vsyncadd %s526, %s544
          %s546 = smul.addr %s23, 32
          %s547 = sadd.s32 %s542, %s546
          %s548 = smul.addr %s547, 128
          %s549 = scalar_lea.hbm %s3, %s548
          %s550 = sshll.u32 %s529, 4
          %s551 = int_to_ptr.vmem [resolvable:$true] %s550
          %556 = dma.vmem_to_hbm [thread:$0]  %s551, 2048, %s549, %s526, 128, 128, 8
        $region36: #{tpu_custom_call.1} parent=31 // pred_fallthru
          _
        // Predicated region
        $region37: #{tpu_custom_call.1} parent=31 // pred_check
          %p557 = pneg %p149
        $region38: #{tpu_custom_call.1} parent=31 // pred_check_branch
          %559 = sbr.rel (%p557) target = $region40
        $region39: #{tpu_custom_call.1} parent=31 // pred_region
          %s560 = smul.u32 16, %s24
        $region40: #{tpu_custom_call.1} parent=31 // pred_fallthru
          _
      $region32: #{tpu_custom_call.1} parent=5 // pred_fallthru
        _
      %p561 = scmp.le.s32.totalorder 2, %s14
      // Predicated region
      $region41: #{tpu_custom_call.1} parent=5 // pred_check
        %p562 = pneg %p561
      $region42: #{tpu_custom_call.1} parent=5 // pred_check_branch
        %564 = sbr.rel (%p562) target = $region44
      $region43: #{tpu_custom_call.1} parent=5 // pred_region
        %s565 = ssub.s32 %s14, 2
        // Predicated region
        $region45: #{tpu_custom_call.1} parent=43 // pred_check
          %p566 = pneg %p127
        $region46: #{tpu_custom_call.1} parent=43 // pred_check_branch
          %568 = sbr.rel (%p566) target = $region48
        $region47: #{tpu_custom_call.1} parent=43 // pred_region
          %s569 = sand.u32 %s112, 1
          %s570 = scalar_lea.sflag [#allocation3], %s569
          %s571 = sand.u32 %s112, 1
          %s572 = smul.addr %s571, 128
          %s573 = scalar_lea.vmem [#allocation2], %s572
          %574 = dma.done %s570, 2048
        $region48: #{tpu_custom_call.1} parent=43 // pred_fallthru
          _
        // Predicated region
        $region49: #{tpu_custom_call.1} parent=43 // pred_check
          %p575 = pneg %p155
        $region50: #{tpu_custom_call.1} parent=43 // pred_check_branch
          %577 = sbr.rel (%p575) target = $region52
        $region51: #{tpu_custom_call.1} parent=43 // pred_region
          %s578 = smul.u32 16, %s26
          %p579 = scmp.lt.s32.totalorder %s25, 1
          %s580 = scalar_select %p579, %s25, 1
          %p581 = scmp.lt.s32.totalorder %s578, 31
          %s582 = scalar_select %p581, %s578, 31
          %s583 = smul.addr %s580, 32
          %s584 = sadd.s32 %s582, %s583
          %s585 = smul.addr %s584, 8
          %s586 = scalar_lea.vmem %s4, %s585
        $region52: #{tpu_custom_call.1} parent=43 // pred_fallthru
          _
      $region44: #{tpu_custom_call.1} parent=5 // pred_fallthru
        _
    $region6: #{tpu_custom_call.1} parent=1 // loop_footer
      %s18 = sadd.s32 1, %s14
    $region7: #{tpu_custom_call.1} parent=1 // loop_footer_branch
      %13 = sbr.rel target = $region3
    $region8: #{tpu_custom_call.1} parent=1 // loop_exit
      _
    %587 = vsyncpa [#allocation3], 1
    %s588 = scalar_lea.sflag [#allocation3], 1
    %589 = vsyncpa %s588, 1

</llo_original>
